<compile_context>
chip_gen: v7x
topology: tpu7x:2x2x1
jax: 0.10.0
libtpu: 0.0.40
codegen_flags: <defaults>
</compile_context>

<pallas_src>
import jax
import jax.numpy as jnp
from jax.experimental import pallas as pl
from jax.experimental.pallas import tpu as pltpu

_LANES = 128
_SUBLANES = 8
_PALLAS_MIN_N = 4096  # below this, XLA's fused FMA beats pallas dispatch cost


def _linear_kernel(wb_ref, x_ref, o_ref):
    # wb_ref: (2,) f32 in SMEM -> [weight, bias]; x_ref/o_ref: (block_rows, 128)
    # VMEM tiles.  y = x * w + b  (exactly nn.Linear(1, 1) on the flattened data).
    w = wb_ref[0]
    b = wb_ref[1]
    o_ref[...] = x_ref[...] * w + b


def _round_up(a, b):
    return pl.cdiv(a, b) * b


def linear_regression_forward(x, weight, bias, *, max_block_rows=2048,
                              force_pallas=False):
    """x: (N, 1) f32, weight: (1, 1) f32, bias: (1,) f32 -> (N, 1) f32."""
    n = x.shape[0]
    w = weight.reshape(()).astype(jnp.float32)
    b = bias.reshape(()).astype(jnp.float32)

    # Tiny-N fast path: one fused multiply-add, no kernel dispatch overhead.
    if n < _PALLAS_MIN_N and not force_pallas:
        return (x.astype(jnp.float32) * w + b).reshape(n, 1)

    # ---- lane-dense layout: flatten to a (rows, 128) slab, rows 8-aligned ----
    rows = _round_up(pl.cdiv(n, _LANES), _SUBLANES)   # NOT rounded to block size
    padded_len = rows * _LANES

    # Row-tile size: big enough to amortize per-step overhead, but keep at
    # least 2 grid steps so both TensorCores on v7x get work.
    block_rows = min(max_block_rows,
                     max(_SUBLANES, _round_up(pl.cdiv(rows, 2), _SUBLANES)))
    grid = (pl.cdiv(rows, block_rows),)               # ragged last block is masked

    flat = x.reshape(-1).astype(jnp.float32)
    flat = jnp.pad(flat, (0, padded_len - n))         # fuses into input DMA
    slab = flat.reshape(rows, _LANES)

    # pack weight + bias into one SMEM scalar array
    wb = jnp.stack([w, b])

    out_slab = pl.pallas_call(
        _linear_kernel,
        out_shape=jax.ShapeDtypeStruct((rows, _LANES), jnp.float32),
        grid=grid,
        in_specs=[
            # scalar [w, b] parked in SMEM (untiled)
            pl.BlockSpec(memory_space=pltpu.MemorySpace.SMEM),
            # lane-dense row tiles, double-buffered by the pipeline
            pl.BlockSpec((block_rows, _LANES), lambda i: (i, 0)),
        ],
        out_specs=pl.BlockSpec((block_rows, _LANES), lambda i: (i, 0)),
        compiler_params=pltpu.CompilerParams(
            dimension_semantics=("parallel",),
            # let the flatten/pad of the slab operand fuse into the input DMA
            allow_input_fusion=[False, True],
        ),
    )(wb, slab)

    # strip padding and restore the (N, 1) column-vector contract
    return out_slab.reshape(-1)[:n].reshape(n, 1)


if __name__ == "__main__":
    # Deterministic parameter init (same shapes as nn.Linear(1, 1)):
    # PyTorch uses U(-sqrt(1/in_features), sqrt(1/in_features)) = U(-1, 1).
    key = jax.random.PRNGKey(0)
    kw, kb = jax.random.split(key)
    weight = jax.random.uniform(kw, (1, 1), jnp.float32, minval=-1.0, maxval=1.0)
    bias = jax.random.uniform(kb, (1,), jnp.float32, minval=-1.0, maxval=1.0)

    # Input data from the original script, shape (23, 1).
    x = jnp.array(
        [12.4, 14.3, 14.5, 14.9, 16.1, 16.9, 16.5, 15.4, 17.0, 17.9, 18.8,
         20.3, 22.4, 19.4, 15.5, 16.7, 17.3, 18.4, 19.2, 17.4, 19.5, 19.7,
         21.2],
        dtype=jnp.float32,
    ).reshape(-1, 1)

    def ref(xv):
        return xv * weight[0, 0] + bias[0]

    # Small case, forced through the Pallas kernel (single (8,128) tile).
    y = linear_regression_forward(x, weight, bias, force_pallas=True)
    y = jax.block_until_ready(y)
    assert y.shape == (23, 1)
    assert jnp.allclose(y, ref(x), atol=1e-6, rtol=1e-6)

    # Small case through the default tiny-N bypass (must match too).
    y_fast = jax.block_until_ready(linear_regression_forward(x, weight, bias))
    assert jnp.allclose(y_fast, ref(x), atol=1e-6, rtol=1e-6)

    # Larger case: exercises the ragged-row slab, >=2 grid steps and the
    # double-buffered, lane-dense streaming path.
    kx = jax.random.PRNGKey(1)
    x_big = jax.random.normal(kx, (200_000, 1), jnp.float32)
    y_big = linear_regression_forward(x_big, weight, bias)
    y_big = jax.block_until_ready(y_big)
    assert y_big.shape == (200_000, 1)
    assert jnp.allclose(y_big, ref(x_big), atol=1e-5, rtol=1e-5)

    print("KERNEL_OK")
</pallas_src>

<mosaic_0001>
module attributes {stable_mosaic.version = 11 : i64} {
  func.func @_linear_kernel(%arg0: i32, %arg1: memref<2xf32, #tpu.memory_space<smem>>, %arg2: memref<8x128xf32, #tpu.memory_space<vmem>>, %arg3: memref<8x128xf32, #tpu.memory_space<vmem>>) attributes {dimension_semantics = [#tpu.dimension_semantics<parallel>], iteration_bounds = array<i64: 1>, scalar_prefetch = 0 : i64, scratch_operands = 0 : i64, tpu.core_type = #tpu.core_type<tc>, window_params = [{transform_indices = @transform_0, window_bounds = array<i64: 2>}, {transform_indices = @transform_1, window_bounds = array<i64: 8, 128>}, {transform_indices = @transform_2, window_bounds = array<i64: 8, 128>}]} {
    %c0 = arith.constant 0 : index
    %0 = memref.load %arg1[%c0] : memref<2xf32, #tpu.memory_space<smem>>
    %c1 = arith.constant 1 : index
    %1 = memref.load %arg1[%c1] : memref<2xf32, #tpu.memory_space<smem>>
    %c0_0 = arith.constant 0 : index
    %c0_1 = arith.constant 0 : index
    %2 = vector.load %arg2[%c0_0, %c0_1] : memref<8x128xf32, #tpu.memory_space<vmem>>, vector<8x128xf32>
    %3 = vector.broadcast %0 : f32 to vector<8x128xf32>
    %4 = arith.mulf %2, %3 : vector<8x128xf32>
    %5 = vector.broadcast %1 : f32 to vector<8x128xf32>
    %6 = arith.addf %4, %5 : vector<8x128xf32>
    %c0_2 = arith.constant 0 : index
    %c0_3 = arith.constant 0 : index
    %7 = vector.load %arg3[%c0_2, %c0_3] : memref<8x128xf32, #tpu.memory_space<vmem>>, vector<8x128xf32>
    tpu.vector_store %arg3[%c0_2, %c0_3], %6 {strides = array<i32>} : memref<8x128xf32, #tpu.memory_space<vmem>>, vector<8x128xf32>,
    return
  }
  func.func @transform_0(%arg0: i32) -> i32 {
    %c0_i32 = arith.constant 0 : i32
    %c0_i32_0 = arith.constant 0 : i32
    return %c0_i32 : i32
  }
  func.func @transform_1(%arg0: i32) -> (i32, i32) {
    %c0_i32 = arith.constant 0 : i32
    %c0_i32_0 = arith.constant 0 : i32
    return %arg0, %c0_i32 : i32, i32
  }
  func.func @transform_2(%arg0: i32) -> (i32, i32) {
    %c0_i32 = arith.constant 0 : i32
    %c0_i32_0 = arith.constant 0 : i32
    return %arg0, %c0_i32 : i32, i32
  }
}

</mosaic_0001>

<llo_original>
// kernel: tpu_custom_call.1
$region0: #{tpu_custom_call.1}
  #allocation0 [shape = 'u32[]', space=smem, size = 0x4, offset = 0x4, fixed_abs, tag = 'smem constant byte address 0x4 - core index']
  #allocation1 [shape = 'u32[144,128]{1,0:T(1,128)}', space=vmem, size = 0x12000, scoped, tag = 'internal scratch']
  %s0 = inlined_call_operand.hbm [shape: f32[2], index: 0, kind: input, shape index: {}]
  %s1 = inlined_call_operand.hbm [shape: f32[8,128], index: 1, kind: input, shape index: {}]
  %s2 = inlined_call_operand.hbm [shape: f32[8,128], index: 2, kind: output, shape index: {}]
  %s3 = sld [smem:[#allocation0]]
  $region26: #{tpu_custom_call.1} parent=0
    _
  %s5 = ssub.s32 1, %s3
  %s6 = scalar_select 0, %s5, %s3
  $region1: #{tpu_custom_call.1} parent=0
    #allocation2 [shape = 'u8[512]{0}', space=smem, size = 0x200, scoped, tag = 'input window, operand 0, single buffered']
    #allocation3 [shape = 's32[1]{0}', space=sflag, size = 0x4, scoped, tag = 'scoped memory for tpu_custom_call.1']
    #allocation4 [shape = 's32[1]{0}', space=sflag, size = 0x4, scoped, tag = 'scoped memory for tpu_custom_call.1']
    #allocation5 [shape = 's32[1]{0}', space=sflag, size = 0x4, scoped, tag = 'scoped memory for tpu_custom_call.1']
    #allocation6 [shape = 'u8[4096]{0}', space=vmem, size = 0x1000, scoped, tag = 'input window, operand 1, single buffered']
    #allocation7 [shape = 'u8[4096]{0}', space=vmem, size = 0x1000, scoped, tag = 'output window, operand 0, single buffered']
    %7 = vsyncpa [#allocation5], 0
    %8 = vsyncpa [#allocation3], 0
    %9 = vsyncpa [#allocation4], 0
    // Predicated region
    $region2: #{tpu_custom_call.1} parent=1 // pred_check
      _
    $region3: #{tpu_custom_call.1} parent=1 // pred_check_branch
      %11 = sbr.rel (0) target = $region5
    $region4: #{tpu_custom_call.1} parent=1 // pred_region
      %s13 = ssub.s32 16, 16
      %14 = vsyncadd [#allocation5], %s13
      %17 = dma.hbm_to_smem %s0, 16, [#allocation2], [#allocation5]
    $region5: #{tpu_custom_call.1} parent=1 // pred_fallthru
      _
    // Predicated region
    $region6: #{tpu_custom_call.1} parent=1 // pred_check
      _
    $region7: #{tpu_custom_call.1} parent=1 // pred_check_branch
      %19 = sbr.rel (0) target = $region9
    $region8: #{tpu_custom_call.1} parent=1 // pred_region
      %s21 = ssub.s32 128, 128
      %22 = vsyncadd [#allocation3], %s21
      %s24 = sshll.u32 [#allocation6], 4
      %s25 = int_to_ptr.vmem [resolvable:$true] %s24
      %27 = dma.hbm_to_vmem [thread:$0]  %s1, 128, %s25, [#allocation3]
    $region9: #{tpu_custom_call.1} parent=1 // pred_fallthru
      _
    // Predicated region
    $region10: #{tpu_custom_call.1} parent=1 // pred_check
      _
    $region11: #{tpu_custom_call.1} parent=1 // pred_check_branch
      %29 = sbr.rel (0) target = $region13
    $region12: #{tpu_custom_call.1} parent=1 // pred_region
      %30 = dma.done [#allocation5], 16
    $region13: #{tpu_custom_call.1} parent=1 // pred_fallthru
      _
    // Predicated region
    $region14: #{tpu_custom_call.1} parent=1 // pred_check
      _
    $region15: #{tpu_custom_call.1} parent=1 // pred_check_branch
      %32 = sbr.rel (0) target = $region17
    $region16: #{tpu_custom_call.1} parent=1 // pred_region
      %33 = dma.done [#allocation3], 128
    $region17: #{tpu_custom_call.1} parent=1 // pred_fallthru
      _
    %34 = sfence
    %s35 = sld [smem:[#allocation2]]
    %s36 = sld [smem:[#allocation2 + $0x1]]
    %v37 = vld [vmem:[#allocation6] sm:$0xff]
    %v38 = vstv %s35
    %v39 = vmul.f32 %v37, %v38
    %v40 = vstv %s36
    %v41 = vadd.f32 %v39, %v40
    %42 = vst [vmem:[#allocation7] sm:$0xff] %v41
    // Predicated region
    $region18: #{tpu_custom_call.1} parent=1 // pred_check
      _
    $region19: #{tpu_custom_call.1} parent=1 // pred_check_branch
      %44 = sbr.rel (0) target = $region21
    $region20: #{tpu_custom_call.1} parent=1 // pred_region
      %s46 = ssub.s32 128, 128
      %47 = vsyncadd [#allocation4], %s46
      %s49 = sshll.u32 [#allocation7], 4
      %s50 = int_to_ptr.vmem [resolvable:$true] %s49
      %52 = dma.vmem_to_hbm [thread:$0]  %s50, 128, %s2, [#allocation4]
    $region21: #{tpu_custom_call.1} parent=1 // pred_fallthru
      _
    // Predicated region
    $region22: #{tpu_custom_call.1} parent=1 // pred_check
      _
    $region23: #{tpu_custom_call.1} parent=1 // pred_check_branch
      %54 = sbr.rel (0) target = $region25
    $region24: #{tpu_custom_call.1} parent=1 // pred_region
      %55 = dma.done [#allocation4], 128
    $region25: #{tpu_custom_call.1} parent=1 // pred_fallthru
      _
    %56 = vsyncpa [#allocation3], 1
    %57 = vsyncpa [#allocation4], 1
    %58 = vsyncpa [#allocation5], 1

</llo_original>
